<compile_context>
chip_gen: v6e
topology: v6e:2x2x1
jax: 0.10.0
libtpu: 0.0.40
codegen_flags: <defaults>
</compile_context>

<pallas_src>
import functools

import jax
import jax.numpy as jnp
from jax.experimental import pallas as pl
from jax.experimental.pallas import tpu as pltpu


def _relu_kernel(x_ref, o_ref):
    # One VPU max per vreg; the kernel is pure HBM streaming (DMA slot bound).
    x = x_ref[...]
    o_ref[...] = jnp.maximum(x, jnp.zeros((), dtype=x.dtype))


# Lane-dense last-dim candidates (widest first). Wide, 128-multiple lanes keep
# stores unmasked and DMA descriptors large.
_LANE_CANDIDATES = (32768, 16384, 8192, 4096, 2048, 1024, 512, 256, 128)


def _pick_block_and_vmem():
    """Per-generation block size / scoped-VMEM limit.

    v7x: 64 MiB physical VMEM per TC -> ~8 MiB blocks, 40 MiB scoped limit.
    v5e/v6e: 128 MiB                 -> ~12 MiB blocks, 64 MiB scoped limit.
    The explicit vmem_limit_bytes matters most on v5e (16 MiB default scoped).
    """
    block_bytes = 8 * 1024 * 1024
    vmem_limit = 40 * 1024 * 1024
    try:
        info_fn = getattr(pltpu, "get_tpu_info", None)
        if info_fn is not None:
            cap = getattr(info_fn(), "vmem_capacity_bytes", None)
            if cap is not None and cap >= 100 * 1024 * 1024:  # v5e / v6e
                block_bytes = 12 * 1024 * 1024
                vmem_limit = 64 * 1024 * 1024
    except Exception:
        pass
    return block_bytes, vmem_limit


def _round_up(v, m):
    return ((v + m - 1) // m) * m


@functools.partial(jax.jit, static_argnames=("block_bytes", "donate_input"))
def custom_relu(x, *, block_bytes=None, donate_input=False):
    """Forward of CustomReLU: relu(x). Module is float32-only; tiling is dtype-generic."""
    orig_shape = x.shape
    dtype = x.dtype
    itemsize = jnp.dtype(dtype).itemsize
    # Sublane packing granularity: f32 -> 8, bf16 -> 16, int8 -> 32.
    sub = {4: 8, 2: 16, 1: 32}.get(itemsize, 8)

    n = x.size
    if n == 0:
        return x

    # Widest lane-dense last dim that divides n exactly (no-pad fast path).
    lanes = next((c for c in _LANE_CANDIDATES if n % c == 0), None)
    if lanes is None:
        # Ragged size: avoid the pad+slice round trip (extra full HBM passes);
        # the plain XLA relu is the cheaper, reviewed choice here.
        return jnp.maximum(x, jnp.zeros((), dtype=dtype))

    rows = n // lanes
    x2d = jnp.reshape(x, (rows, lanes))

    default_block_bytes, vmem_limit = _pick_block_and_vmem()
    if block_bytes is None:
        block_bytes = default_block_bytes

    total_bytes = n * itemsize
    row_bytes = lanes * itemsize
    target_rows = max(sub, (block_bytes // row_bytes) // sub * sub)

    if rows <= target_rows:
        if rows >= 2 * sub and total_bytes >= 2 * 1024 * 1024:
            # Big single-block case: split in two so both v7x TensorCores
            # stream HBM (near-free extra step on single-TC v5e/v6e).
            block_rows = _round_up((rows + 1) // 2, sub)
        else:
            block_rows = rows  # block == full array dims (any row count legal)
    else:
        block_rows = target_rows  # multiple of `sub`; last block may be partial

    num_steps = pl.cdiv(rows, block_rows)
    # Small odd step counts leave one v7x TensorCore imbalanced; halve once.
    if 1 < num_steps < 8 and num_steps % 2 == 1 and block_rows >= 2 * sub:
        block_rows = _round_up(pl.cdiv(block_rows, 2), sub)
        num_steps = pl.cdiv(rows, block_rows)
    grid = (num_steps,)

    pallas_kwargs = {}
    if donate_input:
        # Output reuses the input buffer. Only set this when the caller truly
        # donates x (pair with donate_argnums at the jit call site), otherwise
        # XLA inserts a defensive copy and adds a full HBM pass.
        pallas_kwargs["input_output_aliases"] = {0: 0}

    out2d = pl.pallas_call(
        _relu_kernel,
        out_shape=jax.ShapeDtypeStruct((rows, lanes), dtype),
        grid_spec=pltpu.PrefetchScalarGridSpec(
            num_scalar_prefetch=0,
            grid=grid,
            in_specs=[pl.BlockSpec((block_rows, lanes), lambda i: (i, 0))],
            out_specs=pl.BlockSpec((block_rows, lanes), lambda i: (i, 0)),
        ),
        compiler_params=pltpu.CompilerParams(
            dimension_semantics=("parallel",),
            # 2x double-buffered input + output blocks plus headroom; sized per
            # chip generation in _pick_block_and_vmem (v7x has only 64 MiB).
            vmem_limit_bytes=vmem_limit,
        ),
        **pallas_kwargs,
    )(x2d)

    return out2d.reshape(orig_shape)


# TODO(synk): backward (custom_relu_backward with threshold 0.0) not implemented;
# only the forward pass of the module is translated here.


if __name__ == "__main__":
    key = jax.random.PRNGKey(0)
    # Small NCHW input consistent with the module's intended use (float32 only).
    x = jax.random.normal(key, (2, 4, 16, 16), dtype=jnp.float32)
    y = custom_relu(x)
    jax.block_until_ready(y)
    ref = jnp.maximum(x, 0.0)
    assert y.shape == x.shape and y.dtype == x.dtype
    assert jnp.allclose(y, ref), "mismatch vs reference ReLU"

    # Medium input (4 MiB) to exercise the multi-step grid path.
    x2 = jax.random.normal(jax.random.PRNGKey(1), (8, 16, 64, 128), dtype=jnp.float32)
    y2 = custom_relu(x2)
    jax.block_until_ready(y2)
    assert jnp.allclose(y2, jnp.maximum(x2, 0.0)), "mismatch on multi-block shape"

    # Ragged size -> plain XLA fallback path (no pad/slice round trip).
    x3 = jax.random.normal(jax.random.PRNGKey(2), (3, 5, 7), dtype=jnp.float32)
    y3 = custom_relu(x3)
    jax.block_until_ready(y3)
    assert jnp.allclose(y3, jnp.maximum(x3, 0.0)), "mismatch on ragged shape"

    print("KERNEL_OK")
</pallas_src>

<mosaic_0001>
module attributes {stable_mosaic.version = 11 : i64} {
  func.func @_relu_kernel(%arg0: i32, %arg1: memref<1x2048xf32, #tpu.memory_space<vmem>>, %arg2: memref<1x2048xf32, #tpu.memory_space<vmem>>) attributes {dimension_semantics = [#tpu.dimension_semantics<parallel>], iteration_bounds = array<i64: 1>, scalar_prefetch = 0 : i64, scratch_operands = 0 : i64, tpu.core_type = #tpu.core_type<tc>, window_params = [{transform_indices = @transform_0, window_bounds = array<i64: 1, 2048>}, {transform_indices = @transform_1, window_bounds = array<i64: 1, 2048>}]} {
    %c0 = arith.constant 0 : index
    %c0_0 = arith.constant 0 : index
    %0 = vector.load %arg1[%c0, %c0_0] : memref<1x2048xf32, #tpu.memory_space<vmem>>, vector<1x2048xf32>
    %cst = arith.constant 0.000000e+00 : f32
    %1 = vector.broadcast %cst : f32 to vector<1x2048xf32>
    %2 = arith.maximumf %0, %1 : vector<1x2048xf32>
    %c0_1 = arith.constant 0 : index
    %c0_2 = arith.constant 0 : index
    %3 = vector.load %arg2[%c0_1, %c0_2] : memref<1x2048xf32, #tpu.memory_space<vmem>>, vector<1x2048xf32>
    tpu.vector_store %arg2[%c0_1, %c0_2], %2 {strides = array<i32>} : memref<1x2048xf32, #tpu.memory_space<vmem>>, vector<1x2048xf32>,
    return
  }
  func.func @transform_0(%arg0: i32) -> (i32, i32) {
    %c0_i32 = arith.constant 0 : i32
    %c0_i32_0 = arith.constant 0 : i32
    return %arg0, %c0_i32 : i32, i32
  }
  func.func @transform_1(%arg0: i32) -> (i32, i32) {
    %c0_i32 = arith.constant 0 : i32
    %c0_i32_0 = arith.constant 0 : i32
    return %arg0, %c0_i32 : i32, i32
  }
}

</mosaic_0001>

<llo_original>
// kernel: custom_relu.1
$region0: #{custom_relu.1}
  #allocation0 [shape = 'u32[]', space=smem, size = 0x4, offset = 0x4, fixed_abs, tag = 'smem constant byte address 0x4 - core index']
  #allocation1 [shape = 'u32[144,128]{1,0:T(1,128)}', space=vmem, size = 0x12000, scoped, tag = 'internal scratch']
  %s0 = inlined_call_operand.vmem [shape: f32[1,2048], index: 0, kind: input, shape index: {}]
  %s1 = inlined_call_operand.vmem [shape: f32[1,2048], index: 1, kind: output, shape index: {}]
  %s2 = sld [smem:[#allocation0]]
  $region14: #{custom_relu.1} parent=0
    _
  %s4 = ssub.s32 1, %s2
  %s5 = scalar_select 0, %s4, %s2
  // Predicated region
  $region2: #{custom_relu.1} parent=0 // pred_check
    _
  $region3: #{custom_relu.1} parent=0 // pred_check_branch
    %7 = sbr.rel (0) target = $region5
  $region4: #{custom_relu.1} parent=0 // pred_region
    _
  $region5: #{custom_relu.1} parent=0 // pred_fallthru
    _
  %v8 = vld [vmem:[%s0] sm:$0xff]
  %v9 = vld [vmem:[%s0 + $0x8] sm:$0xff]
  %v10 = vmax.f32 %v8, 0.0
  %v11 = vmax.f32 %v9, 0.0
  %12 = vst [vmem:[%s1] sm:$0xff] %v10
  %13 = vst [vmem:[%s1 + $0x8] sm:$0xff] %v11
  // Predicated region
  $region6: #{custom_relu.1} parent=0 // pred_check
    _
  $region7: #{custom_relu.1} parent=0 // pred_check_branch
    %15 = sbr.rel (0) target = $region9
  $region8: #{custom_relu.1} parent=0 // pred_region
    _
  $region9: #{custom_relu.1} parent=0 // pred_fallthru
    _
  // Predicated region
  $region10: #{custom_relu.1} parent=0 // pred_check
    _
  $region11: #{custom_relu.1} parent=0 // pred_check_branch
    %17 = sbr.rel (0) target = $region13
  $region12: #{custom_relu.1} parent=0 // pred_region
    _
  $region13: #{custom_relu.1} parent=0 // pred_fallthru
    _

</llo_original>
